<compile_context>
chip_gen: v5e
topology: v5e:2x2
jax: 0.10.0
libtpu: 0.0.40
codegen_flags: <defaults>
</compile_context>

<pallas_src>
import functools

import numpy as np

import jax
import jax.numpy as jnp
from jax.experimental import pallas as pl
from jax.experimental.pallas import tpu as pltpu

try:
    from scipy.optimize import linear_sum_assignment as _scipy_lsa
except ImportError:  # pragma: no cover
    _scipy_lsa = None


# ---------------------------------------------------------------------------
# Pallas kernel: per-batch cost matrix [T_pad, Q]
# ---------------------------------------------------------------------------
def _cost_kernel(logits_ref, pboxes_ref, tlabels_ref, tboxes_ref, out_ref, *,
                 w_class, w_bbox, w_giou):
    """One grid step = one batch element.

    logits_ref : (1, Q, C)  f32   pred logits (native layout, C on lanes)
    pboxes_ref : (1, 4, Q)  f32   pred boxes, coords on sublanes, Q on lanes
    tlabels_ref: (1, Tp, 1) i32   padded target labels
    tboxes_ref : (1, Tp, 4) f32   padded target boxes (cx, cy, w, h)
    out_ref    : (1, Tp, Q) f32   cost matrix, Q lane-dense
    """
    logits = logits_ref[0].astype(jnp.float32)                 # (Q, C)
    Q, C = logits.shape

    # Row-wise softmax over classes (numerically stable).
    m = jnp.max(logits, axis=-1, keepdims=True)
    e = jnp.exp(logits - m)
    probs = e / jnp.sum(e, axis=-1, keepdims=True)             # (Q, C)

    # Classification cost: cost_class[t, q] = -probs[q, label_t]
    labels = tlabels_ref[0]                                    # (Tp, 1) int32
    Tp = labels.shape[0]
    onehot = (jax.lax.broadcasted_iota(jnp.int32, (Tp, C), 1) == labels
              ).astype(jnp.float32)                            # (Tp, C)
    cost_class = -jax.lax.dot_general(
        onehot, probs,
        dimension_numbers=(((1,), (1,)), ((), ())),            # contract on C
        preferred_element_type=jnp.float32)                    # (Tp, Q)

    # Box tensors split per coordinate: pred as (1, Q) rows, target as (Tp, 1) cols.
    pb = pboxes_ref[0].astype(jnp.float32)                     # (4, Q)
    tb = tboxes_ref[0].astype(jnp.float32)                     # (Tp, 4)
    p_cx, p_cy, p_w, p_h = (pb[0:1, :], pb[1:2, :], pb[2:3, :], pb[3:4, :])
    t_cx, t_cy, t_w, t_h = (tb[:, 0:1], tb[:, 1:2], tb[:, 2:3], tb[:, 3:4])

    # L1 (cdist, p=1) in cxcywh space.
    cost_bbox = (jnp.abs(p_cx - t_cx) + jnp.abs(p_cy - t_cy)
                 + jnp.abs(p_w - t_w) + jnp.abs(p_h - t_h))    # (Tp, Q)

    # GIoU cost in xyxy space.
    p_x1 = p_cx - 0.5 * p_w; p_y1 = p_cy - 0.5 * p_h
    p_x2 = p_cx + 0.5 * p_w; p_y2 = p_cy + 0.5 * p_h
    t_x1 = t_cx - 0.5 * t_w; t_y1 = t_cy - 0.5 * t_h
    t_x2 = t_cx + 0.5 * t_w; t_y2 = t_cy + 0.5 * t_h

    inter_w = jnp.maximum(jnp.minimum(p_x2, t_x2) - jnp.maximum(p_x1, t_x1), 0.0)
    inter_h = jnp.maximum(jnp.minimum(p_y2, t_y2) - jnp.maximum(p_y1, t_y1), 0.0)
    inter = inter_w * inter_h                                  # (Tp, Q)

    area_p = (p_x2 - p_x1) * (p_y2 - p_y1)                     # (1, Q)
    area_t = (t_x2 - t_x1) * (t_y2 - t_y1)                     # (Tp, 1)
    union = area_p + area_t - inter                            # (Tp, Q)
    iou = inter / (union + 1e-7)

    enc_w = jnp.maximum(p_x2, t_x2) - jnp.minimum(p_x1, t_x1)
    enc_h = jnp.maximum(p_y2, t_y2) - jnp.minimum(p_y1, t_y1)
    enc = enc_w * enc_h
    giou = iou - (enc - union) / (enc + 1e-7)
    cost_giou = 1.0 - giou                                     # (Tp, Q)

    out_ref[0] = (w_class * cost_class + w_bbox * cost_bbox + w_giou * cost_giou)


def _build_cost_matrix(pred_logits, pred_boxes_t, tgt_labels_pad, tgt_boxes_pad,
                       *, cost_class, cost_bbox, cost_giou):
    B, Q, C = pred_logits.shape
    Tp = tgt_labels_pad.shape[1]
    kernel = functools.partial(_cost_kernel,
                               w_class=float(cost_class),
                               w_bbox=float(cost_bbox),
                               w_giou=float(cost_giou))
    return pl.pallas_call(
        kernel,
        out_shape=jax.ShapeDtypeStruct((B, Tp, Q), jnp.float32),
        grid_spec=pltpu.PrefetchScalarGridSpec(
            num_scalar_prefetch=0,
            grid=(B,),
            in_specs=[
                pl.BlockSpec((1, Q, C), lambda b: (b, 0, 0)),
                pl.BlockSpec((1, 4, Q), lambda b: (b, 0, 0)),
                pl.BlockSpec((1, Tp, 1), lambda b: (b, 0, 0)),
                pl.BlockSpec((1, Tp, 4), lambda b: (b, 0, 0)),
            ],
            out_specs=pl.BlockSpec((1, Tp, Q), lambda b: (b, 0, 0)),
        ),
        compiler_params=pltpu.CompilerParams(
            dimension_semantics=("parallel",),   # batch elements are independent
        ),
    )(pred_logits, pred_boxes_t, tgt_labels_pad, tgt_boxes_pad)


# ---------------------------------------------------------------------------
# Host-side assignment (same as the PyTorch module: C.cpu().numpy() + Hungarian)
# ---------------------------------------------------------------------------
def _linear_sum_assignment(cost):
    """cost: [n_rows, n_cols] with n_rows >= n_cols. Returns (row_ind, col_ind)."""
    if _scipy_lsa is not None:
        return _scipy_lsa(cost)
    # TODO(synk): the Hungarian solve is sequential/data-dependent host work with
    # no clean Pallas equivalent; exact brute-force fallback (tiny shapes only).
    import itertools
    n_rows, n_cols = cost.shape
    best, best_val = None, np.inf
    cols = np.arange(n_cols)
    for perm in itertools.permutations(range(n_rows), n_cols):
        v = cost[list(perm), cols].sum()
        if v < best_val:
            best_val, best = v, perm
    rows = np.asarray(best, dtype=np.int64)
    order = np.argsort(rows)
    return rows[order], cols[order]


def hungarian_match(outputs, targets, cost_class=1.0, cost_bbox=1.0, cost_giou=1.0):
    """Pallas-accelerated HungarianMatcher.forward.

    outputs: dict with 'pred_logits' [B, Q, C] and 'pred_boxes' [B, Q, 4].
    targets: list of dicts with 'labels' [T_b] and 'boxes' [T_b, 4].
    Returns list of (pred_indices + b*Q, gt_indices) int32 arrays.
    """
    pred_logits = jnp.asarray(outputs['pred_logits'], dtype=jnp.float32)
    pred_boxes = jnp.asarray(outputs['pred_boxes'], dtype=jnp.float32)
    B, Q, C = pred_logits.shape
    assert pred_boxes.shape == (B, Q, 4)

    t_counts = [int(np.asarray(t['labels']).shape[0]) for t in targets]
    max_t = max(max(t_counts), 1)
    Tp = ((max_t + 7) // 8) * 8            # pad targets to a sublane multiple

    labels_pad = np.zeros((B, Tp, 1), dtype=np.int32)
    boxes_pad = np.zeros((B, Tp, 4), dtype=np.float32)
    for b, t in enumerate(targets):
        n = t_counts[b]
        if n:
            labels_pad[b, :n, 0] = np.asarray(t['labels'], dtype=np.int32)
            boxes_pad[b, :n, :] = np.asarray(t['boxes'], dtype=np.float32)

    # Tiny layout transform only (B*Q*4 floats) so pred coords sit on sublanes
    # and Q stays lane-dense inside the kernel.
    pred_boxes_t = jnp.transpose(pred_boxes, (0, 2, 1))        # [B, 4, Q]

    cost = _build_cost_matrix(
        pred_logits, pred_boxes_t,
        jnp.asarray(labels_pad), jnp.asarray(boxes_pad),
        cost_class=cost_class, cost_bbox=cost_bbox, cost_giou=cost_giou)
    cost_np = np.asarray(jax.block_until_ready(cost))          # [B, Tp, Q]

    indices = []
    for b in range(B):
        n = t_counts[b]
        if n == 0:
            indices.append((jnp.zeros((0,), jnp.int32), jnp.zeros((0,), jnp.int32)))
            continue
        Cb = cost_np[b, :n, :].T                               # [Q, n] valid slice
        row_ind, col_ind = _linear_sum_assignment(Cb)
        indices.append((jnp.asarray(row_ind + b * Q, dtype=jnp.int32),
                        jnp.asarray(col_ind, dtype=jnp.int32)))
    return indices


# ---------------------------------------------------------------------------
# Pure-JAX reference for the cost matrix (per-pair GIoU, DETR semantics)
# ---------------------------------------------------------------------------
def _cost_matrix_ref(pred_logits, pred_boxes, labels, boxes,
                     w_class=1.0, w_bbox=1.0, w_giou=1.0):
    probs = jax.nn.softmax(pred_logits.astype(jnp.float32), axis=-1)   # [Q, C]
    cost_class = -probs[:, labels]                                     # [Q, T]
    cost_bbox = jnp.sum(jnp.abs(pred_boxes[:, None, :] - boxes[None, :, :]), axis=-1)

    def to_xyxy(b):
        cx, cy, w, h = b[..., 0], b[..., 1], b[..., 2], b[..., 3]
        return jnp.stack([cx - 0.5 * w, cy - 0.5 * h, cx + 0.5 * w, cy + 0.5 * h], axis=-1)

    p = to_xyxy(pred_boxes)[:, None, :]
    t = to_xyxy(boxes)[None, :, :]
    ix1 = jnp.maximum(p[..., 0], t[..., 0]); iy1 = jnp.maximum(p[..., 1], t[..., 1])
    ix2 = jnp.minimum(p[..., 2], t[..., 2]); iy2 = jnp.minimum(p[..., 3], t[..., 3])
    inter = jnp.clip(ix2 - ix1, 0) * jnp.clip(iy2 - iy1, 0)
    ap = (p[..., 2] - p[..., 0]) * (p[..., 3] - p[..., 1])
    at = (t[..., 2] - t[..., 0]) * (t[..., 3] - t[..., 1])
    union = ap + at - inter
    iou = inter / (union + 1e-7)
    ex1 = jnp.minimum(p[..., 0], t[..., 0]); ey1 = jnp.minimum(p[..., 1], t[..., 1])
    ex2 = jnp.maximum(p[..., 2], t[..., 2]); ey2 = jnp.maximum(p[..., 3], t[..., 3])
    enc = (ex2 - ex1) * (ey2 - ey1)
    giou = iou - (enc - union) / (enc + 1e-7)
    return w_class * cost_class + w_bbox * cost_bbox + w_giou * (1.0 - giou)   # [Q, T]


if __name__ == "__main__":
    key = jax.random.PRNGKey(0)
    B, Q, C = 2, 16, 5          # small DETR-style shapes: 16 queries, 5 classes
    t_counts = [3, 2]           # targets per batch element
    k1, k2, k3, k4 = jax.random.split(key, 4)

    pred_logits = jax.random.normal(k1, (B, Q, C), dtype=jnp.float32)
    p_cxcy = jax.random.uniform(k2, (B, Q, 2), minval=0.2, maxval=0.8)
    p_wh = jax.random.uniform(k2, (B, Q, 2), minval=0.05, maxval=0.3)
    pred_boxes = jnp.concatenate([p_cxcy, p_wh], axis=-1)

    targets = []
    for b in range(B):
        kb_l, kb_b = jax.random.split(jax.random.fold_in(k3, b))
        n = t_counts[b]
        t_cxcy = jax.random.uniform(kb_b, (n, 2), minval=0.2, maxval=0.8)
        t_wh = jax.random.uniform(jax.random.fold_in(kb_b, 1), (n, 2),
                                  minval=0.05, maxval=0.3)
        targets.append({
            'labels': jax.random.randint(kb_l, (n,), 0, C, dtype=jnp.int32),
            'boxes': jnp.concatenate([t_cxcy, t_wh], axis=-1),
        })

    # Run the Pallas cost-matrix kernel + host Hungarian assignment.
    indices = hungarian_match({'pred_logits': pred_logits, 'pred_boxes': pred_boxes},
                              targets, cost_class=1.0, cost_bbox=1.0, cost_giou=1.0)
    indices = [(jax.block_until_ready(i), jax.block_until_ready(j)) for i, j in indices]

    # Verify the kernel-built cost matrix against the pure-JAX reference.
    Tp = ((max(t_counts) + 7) // 8) * 8
    labels_pad = np.zeros((B, Tp, 1), dtype=np.int32)
    boxes_pad = np.zeros((B, Tp, 4), dtype=np.float32)
    for b, t in enumerate(targets):
        n = t_counts[b]
        labels_pad[b, :n, 0] = np.asarray(t['labels'])
        boxes_pad[b, :n, :] = np.asarray(t['boxes'])
    cost_kernel = np.asarray(jax.block_until_ready(_build_cost_matrix(
        pred_logits, jnp.transpose(pred_boxes, (0, 2, 1)),
        jnp.asarray(labels_pad), jnp.asarray(boxes_pad),
        cost_class=1.0, cost_bbox=1.0, cost_giou=1.0)))

    for b in range(B):
        n = t_counts[b]
        ref = np.asarray(_cost_matrix_ref(pred_logits[b], pred_boxes[b],
                                          targets[b]['labels'], targets[b]['boxes']))
        got = cost_kernel[b, :n, :].T                           # [Q, n]
        assert np.allclose(got, ref, rtol=1e-5, atol=1e-5), (b, got, ref)

        # Sanity: valid matching (distinct queries / gts, within range).
        pi, gi = np.asarray(indices[b][0]) - b * Q, np.asarray(indices[b][1])
        assert len(pi) == n and len(set(pi.tolist())) == n
        assert sorted(gi.tolist()) == list(range(n))
        assert (0 <= pi).all() and (pi < Q).all()

    print("KERNEL_OK")
</pallas_src>

<mosaic_0001>
module attributes {stable_mosaic.version = 11 : i64} {
  func.func @_cost_kernel(%arg0: i32, %arg1: memref<1x16x5xf32, #tpu.memory_space<vmem>>, %arg2: memref<1x4x16xf32, #tpu.memory_space<vmem>>, %arg3: memref<1x8x1xi32, #tpu.memory_space<vmem>>, %arg4: memref<1x8x4xf32, #tpu.memory_space<vmem>>, %arg5: memref<1x8x16xf32, #tpu.memory_space<vmem>>) attributes {dimension_semantics = [#tpu.dimension_semantics<parallel>], iteration_bounds = array<i64: 2>, scalar_prefetch = 0 : i64, scratch_operands = 0 : i64, tpu.core_type = #tpu.core_type<tc>, window_params = [{transform_indices = @transform_0, window_bounds = array<i64: 1, 16, 5>}, {transform_indices = @transform_1, window_bounds = array<i64: 1, 4, 16>}, {transform_indices = @transform_2, window_bounds = array<i64: 1, 8, 1>}, {transform_indices = @transform_3, window_bounds = array<i64: 1, 8, 4>}, {transform_indices = @transform_4, window_bounds = array<i64: 1, 8, 16>}]} {
    %c0 = arith.constant 0 : index
    %c0_0 = arith.constant 0 : index
    %c0_1 = arith.constant 0 : index
    %0 = vector.load %arg1[%c0, %c0_0, %c0_1] : memref<1x16x5xf32, #tpu.memory_space<vmem>>, vector<1x16x5xf32>
    %1 = vector.shape_cast %0 : vector<1x16x5xf32> to vector<16x5xf32>
    %cst = arith.constant dense<0xFF800000> : vector<16xf32>
    %2 = vector.multi_reduction <maximumf>, %1, %cst [1] : vector<16x5xf32> to vector<16xf32>
    %3 = vector.shape_cast %2 : vector<16xf32> to vector<16x1xf32>
    %4 = vector.broadcast %3 : vector<16x1xf32> to vector<16x5xf32>
    %5 = arith.subf %1, %4 : vector<16x5xf32>
    %6 = math.exp %5 : vector<16x5xf32>
    %cst_2 = arith.constant dense<0.000000e+00> : vector<16xf32>
    %7 = vector.multi_reduction <add>, %6, %cst_2 [1] : vector<16x5xf32> to vector<16xf32>
    %8 = vector.shape_cast %7 : vector<16xf32> to vector<16x1xf32>
    %9 = vector.broadcast %8 : vector<16x1xf32> to vector<16x5xf32>
    %10 = arith.divf %6, %9 : vector<16x5xf32>
    %c0_3 = arith.constant 0 : index
    %c0_4 = arith.constant 0 : index
    %c0_5 = arith.constant 0 : index
    %11 = vector.load %arg3[%c0_3, %c0_4, %c0_5] : memref<1x8x1xi32, #tpu.memory_space<vmem>>, vector<1x8x1xi32>
    %12 = vector.shape_cast %11 : vector<1x8x1xi32> to vector<8x1xi32>
    %13 = tpu.iota {dimensions = array<i32: 1>} : vector<8x5xi32>
    %14 = vector.broadcast %12 : vector<8x1xi32> to vector<8x5xi32>
    %15 = arith.cmpi eq, %13, %14 : vector<8x5xi32>
    %16 = arith.extui %15 : vector<8x5xi1> to vector<8x5xi32>
    %17 = arith.sitofp %16 : vector<8x5xi32> to vector<8x5xf32>
    %cst_6 = arith.constant dense<0.000000e+00> : vector<8x16xf32>
    %18 = tpu.matmul %17, %10, %cst_6 {dimension_numbers = #tpu.dot_dimension_numbers<[1], [1], [0], [0], [0, 0, 1, 0], [], []>} : vector<8x5xf32>, vector<16x5xf32>, vector<8x16xf32> -> vector<8x16xf32>
    %cst_7 = arith.constant 0.000000e+00 : f32
    %19 = vector.broadcast %cst_7 : f32 to vector<8x16xf32>
    %20 = arith.subf %19, %18 : vector<8x16xf32>
    %c0_8 = arith.constant 0 : index
    %c0_9 = arith.constant 0 : index
    %c0_10 = arith.constant 0 : index
    %21 = vector.load %arg2[%c0_8, %c0_9, %c0_10] : memref<1x4x16xf32, #tpu.memory_space<vmem>>, vector<1x4x16xf32>
    %22 = vector.shape_cast %21 : vector<1x4x16xf32> to vector<4x16xf32>
    %c0_11 = arith.constant 0 : index
    %c0_12 = arith.constant 0 : index
    %c0_13 = arith.constant 0 : index
    %23 = vector.load %arg4[%c0_11, %c0_12, %c0_13] : memref<1x8x4xf32, #tpu.memory_space<vmem>>, vector<1x8x4xf32>
    %24 = vector.shape_cast %23 : vector<1x8x4xf32> to vector<8x4xf32>
    %25 = vector.extract_strided_slice %22 {offsets = [0, 0], sizes = [1, 16], strides = [1, 1]} : vector<4x16xf32> to vector<1x16xf32>
    %26 = vector.extract_strided_slice %22 {offsets = [1, 0], sizes = [1, 16], strides = [1, 1]} : vector<4x16xf32> to vector<1x16xf32>
    %27 = vector.extract_strided_slice %22 {offsets = [2, 0], sizes = [1, 16], strides = [1, 1]} : vector<4x16xf32> to vector<1x16xf32>
    %28 = vector.extract_strided_slice %22 {offsets = [3, 0], sizes = [1, 16], strides = [1, 1]} : vector<4x16xf32> to vector<1x16xf32>
    %29 = vector.extract_strided_slice %24 {offsets = [0, 0], sizes = [8, 1], strides = [1, 1]} : vector<8x4xf32> to vector<8x1xf32>
    %30 = vector.extract_strided_slice %24 {offsets = [0, 1], sizes = [8, 1], strides = [1, 1]} : vector<8x4xf32> to vector<8x1xf32>
    %31 = vector.extract_strided_slice %24 {offsets = [0, 2], sizes = [8, 1], strides = [1, 1]} : vector<8x4xf32> to vector<8x1xf32>
    %32 = vector.extract_strided_slice %24 {offsets = [0, 3], sizes = [8, 1], strides = [1, 1]} : vector<8x4xf32> to vector<8x1xf32>
    %33 = vector.broadcast %25 : vector<1x16xf32> to vector<8x16xf32>
    %34 = vector.broadcast %29 : vector<8x1xf32> to vector<8x16xf32>
    %35 = arith.subf %33, %34 : vector<8x16xf32>
    %36 = math.absf %35 : vector<8x16xf32>
    %37 = vector.broadcast %26 : vector<1x16xf32> to vector<8x16xf32>
    %38 = vector.broadcast %30 : vector<8x1xf32> to vector<8x16xf32>
    %39 = arith.subf %37, %38 : vector<8x16xf32>
    %40 = math.absf %39 : vector<8x16xf32>
    %41 = arith.addf %36, %40 : vector<8x16xf32>
    %42 = vector.broadcast %27 : vector<1x16xf32> to vector<8x16xf32>
    %43 = vector.broadcast %31 : vector<8x1xf32> to vector<8x16xf32>
    %44 = arith.subf %42, %43 : vector<8x16xf32>
    %45 = math.absf %44 : vector<8x16xf32>
    %46 = arith.addf %41, %45 : vector<8x16xf32>
    %47 = vector.broadcast %28 : vector<1x16xf32> to vector<8x16xf32>
    %48 = vector.broadcast %32 : vector<8x1xf32> to vector<8x16xf32>
    %49 = arith.subf %47, %48 : vector<8x16xf32>
    %50 = math.absf %49 : vector<8x16xf32>
    %51 = arith.addf %46, %50 : vector<8x16xf32>
    %cst_14 = arith.constant 5.000000e-01 : f32
    %52 = vector.broadcast %cst_14 : f32 to vector<1x16xf32>
    %53 = arith.mulf %52, %27 : vector<1x16xf32>
    %54 = arith.subf %25, %53 : vector<1x16xf32>
    %cst_15 = arith.constant 5.000000e-01 : f32
    %55 = vector.broadcast %cst_15 : f32 to vector<1x16xf32>
    %56 = arith.mulf %55, %28 : vector<1x16xf32>
    %57 = arith.subf %26, %56 : vector<1x16xf32>
    %cst_16 = arith.constant 5.000000e-01 : f32
    %58 = vector.broadcast %cst_16 : f32 to vector<1x16xf32>
    %59 = arith.mulf %58, %27 : vector<1x16xf32>
    %60 = arith.addf %25, %59 : vector<1x16xf32>
    %cst_17 = arith.constant 5.000000e-01 : f32
    %61 = vector.broadcast %cst_17 : f32 to vector<1x16xf32>
    %62 = arith.mulf %61, %28 : vector<1x16xf32>
    %63 = arith.addf %26, %62 : vector<1x16xf32>
    %cst_18 = arith.constant 5.000000e-01 : f32
    %64 = vector.broadcast %cst_18 : f32 to vector<8x1xf32>
    %65 = arith.mulf %64, %31 : vector<8x1xf32>
    %66 = arith.subf %29, %65 : vector<8x1xf32>
    %cst_19 = arith.constant 5.000000e-01 : f32
    %67 = vector.broadcast %cst_19 : f32 to vector<8x1xf32>
    %68 = arith.mulf %67, %32 : vector<8x1xf32>
    %69 = arith.subf %30, %68 : vector<8x1xf32>
    %cst_20 = arith.constant 5.000000e-01 : f32
    %70 = vector.broadcast %cst_20 : f32 to vector<8x1xf32>
    %71 = arith.mulf %70, %31 : vector<8x1xf32>
    %72 = arith.addf %29, %71 : vector<8x1xf32>
    %cst_21 = arith.constant 5.000000e-01 : f32
    %73 = vector.broadcast %cst_21 : f32 to vector<8x1xf32>
    %74 = arith.mulf %73, %32 : vector<8x1xf32>
    %75 = arith.addf %30, %74 : vector<8x1xf32>
    %76 = vector.broadcast %60 : vector<1x16xf32> to vector<8x16xf32>
    %77 = vector.broadcast %72 : vector<8x1xf32> to vector<8x16xf32>
    %78 = arith.minimumf %76, %77 : vector<8x16xf32>
    %79 = vector.broadcast %54 : vector<1x16xf32> to vector<8x16xf32>
    %80 = vector.broadcast %66 : vector<8x1xf32> to vector<8x16xf32>
    %81 = arith.maximumf %79, %80 : vector<8x16xf32>
    %82 = arith.subf %78, %81 : vector<8x16xf32>
    %cst_22 = arith.constant 0.000000e+00 : f32
    %83 = vector.broadcast %cst_22 : f32 to vector<8x16xf32>
    %84 = arith.maximumf %82, %83 : vector<8x16xf32>
    %85 = vector.broadcast %63 : vector<1x16xf32> to vector<8x16xf32>
    %86 = vector.broadcast %75 : vector<8x1xf32> to vector<8x16xf32>
    %87 = arith.minimumf %85, %86 : vector<8x16xf32>
    %88 = vector.broadcast %57 : vector<1x16xf32> to vector<8x16xf32>
    %89 = vector.broadcast %69 : vector<8x1xf32> to vector<8x16xf32>
    %90 = arith.maximumf %88, %89 : vector<8x16xf32>
    %91 = arith.subf %87, %90 : vector<8x16xf32>
    %cst_23 = arith.constant 0.000000e+00 : f32
    %92 = vector.broadcast %cst_23 : f32 to vector<8x16xf32>
    %93 = arith.maximumf %91, %92 : vector<8x16xf32>
    %94 = arith.mulf %84, %93 : vector<8x16xf32>
    %95 = arith.subf %60, %54 : vector<1x16xf32>
    %96 = arith.subf %63, %57 : vector<1x16xf32>
    %97 = arith.mulf %95, %96 : vector<1x16xf32>
    %98 = arith.subf %72, %66 : vector<8x1xf32>
    %99 = arith.subf %75, %69 : vector<8x1xf32>
    %100 = arith.mulf %98, %99 : vector<8x1xf32>
    %101 = vector.broadcast %97 : vector<1x16xf32> to vector<8x16xf32>
    %102 = vector.broadcast %100 : vector<8x1xf32> to vector<8x16xf32>
    %103 = arith.addf %101, %102 : vector<8x16xf32>
    %104 = arith.subf %103, %94 : vector<8x16xf32>
    %cst_24 = arith.constant 1.000000e-07 : f32
    %105 = vector.broadcast %cst_24 : f32 to vector<8x16xf32>
    %106 = arith.addf %104, %105 : vector<8x16xf32>
    %107 = arith.divf %94, %106 : vector<8x16xf32>
    %108 = vector.broadcast %60 : vector<1x16xf32> to vector<8x16xf32>
    %109 = vector.broadcast %72 : vector<8x1xf32> to vector<8x16xf32>
    %110 = arith.maximumf %108, %109 : vector<8x16xf32>
    %111 = vector.broadcast %54 : vector<1x16xf32> to vector<8x16xf32>
    %112 = vector.broadcast %66 : vector<8x1xf32> to vector<8x16xf32>
    %113 = arith.minimumf %111, %112 : vector<8x16xf32>
    %114 = arith.subf %110, %113 : vector<8x16xf32>
    %115 = vector.broadcast %63 : vector<1x16xf32> to vector<8x16xf32>
    %116 = vector.broadcast %75 : vector<8x1xf32> to vector<8x16xf32>
    %117 = arith.maximumf %115, %116 : vector<8x16xf32>
    %118 = vector.broadcast %57 : vector<1x16xf32> to vector<8x16xf32>
    %119 = vector.broadcast %69 : vector<8x1xf32> to vector<8x16xf32>
    %120 = arith.minimumf %118, %119 : vector<8x16xf32>
    %121 = arith.subf %117, %120 : vector<8x16xf32>
    %122 = arith.mulf %114, %121 : vector<8x16xf32>
    %123 = arith.subf %122, %104 : vector<8x16xf32>
    %cst_25 = arith.constant 1.000000e-07 : f32
    %124 = vector.broadcast %cst_25 : f32 to vector<8x16xf32>
    %125 = arith.addf %122, %124 : vector<8x16xf32>
    %126 = arith.divf %123, %125 : vector<8x16xf32>
    %127 = arith.subf %107, %126 : vector<8x16xf32>
    %cst_26 = arith.constant 1.000000e+00 : f32
    %128 = vector.broadcast %cst_26 : f32 to vector<8x16xf32>
    %129 = arith.subf %128, %127 : vector<8x16xf32>
    %cst_27 = arith.constant 1.000000e+00 : f32
    %130 = vector.broadcast %cst_27 : f32 to vector<8x16xf32>
    %131 = arith.mulf %130, %20 : vector<8x16xf32>
    %cst_28 = arith.constant 1.000000e+00 : f32
    %132 = vector.broadcast %cst_28 : f32 to vector<8x16xf32>
    %133 = arith.mulf %132, %51 : vector<8x16xf32>
    %134 = arith.addf %131, %133 : vector<8x16xf32>
    %cst_29 = arith.constant 1.000000e+00 : f32
    %135 = vector.broadcast %cst_29 : f32 to vector<8x16xf32>
    %136 = arith.mulf %135, %129 : vector<8x16xf32>
    %137 = arith.addf %134, %136 : vector<8x16xf32>
    %c0_30 = arith.constant 0 : index
    %c0_31 = arith.constant 0 : index
    %c0_32 = arith.constant 0 : index
    %138 = vector.load %arg5[%c0_30, %c0_31, %c0_32] : memref<1x8x16xf32, #tpu.memory_space<vmem>>, vector<1x8x16xf32>
    %139 = vector.shape_cast %138 : vector<1x8x16xf32> to vector<8x16xf32>
    %140 = vector.shape_cast %137 : vector<8x16xf32> to vector<1x8x16xf32>
    tpu.vector_store %arg5[%c0_30, %c0_31, %c0_32], %140 {strides = array<i32>} : memref<1x8x16xf32, #tpu.memory_space<vmem>>, vector<1x8x16xf32>,
    return
  }
  func.func @transform_0(%arg0: i32) -> (i32, i32, i32) {
    %c0_i32 = arith.constant 0 : i32
    %c0_i32_0 = arith.constant 0 : i32
    %c0_i32_1 = arith.constant 0 : i32
    return %arg0, %c0_i32, %c0_i32_0 : i32, i32, i32
  }
  func.func @transform_1(%arg0: i32) -> (i32, i32, i32) {
    %c0_i32 = arith.constant 0 : i32
    %c0_i32_0 = arith.constant 0 : i32
    %c0_i32_1 = arith.constant 0 : i32
    return %arg0, %c0_i32, %c0_i32_0 : i32, i32, i32
  }
  func.func @transform_2(%arg0: i32) -> (i32, i32, i32) {
    %c0_i32 = arith.constant 0 : i32
    %c0_i32_0 = arith.constant 0 : i32
    %c0_i32_1 = arith.constant 0 : i32
    return %arg0, %c0_i32, %c0_i32_0 : i32, i32, i32
  }
  func.func @transform_3(%arg0: i32) -> (i32, i32, i32) {
    %c0_i32 = arith.constant 0 : i32
    %c0_i32_0 = arith.constant 0 : i32
    %c0_i32_1 = arith.constant 0 : i32
    return %arg0, %c0_i32, %c0_i32_0 : i32, i32, i32
  }
  func.func @transform_4(%arg0: i32) -> (i32, i32, i32) {
    %c0_i32 = arith.constant 0 : i32
    %c0_i32_0 = arith.constant 0 : i32
    %c0_i32_1 = arith.constant 0 : i32
    return %arg0, %c0_i32, %c0_i32_0 : i32, i32, i32
  }
}

</mosaic_0001>

<llo_original>
// kernel: tpu_custom_call.1
$region0: #{tpu_custom_call.1}
  #allocation0 [shape = 'u32[]', space=smem, size = 0x4, offset = 0x4, fixed_abs, tag = 'smem constant byte address 0x4 - core index']
  #allocation1 [shape = 'u32[72,128]{1,0:T(1,128)}', space=vmem, size = 0x9000, scoped, tag = 'internal scratch']
  %s0 = inlined_call_operand.vmem [shape: f32[2,16,5], index: 0, kind: input, shape index: {}]
  %s1 = inlined_call_operand.vmem [shape: f32[2,4,16], index: 1, kind: input, shape index: {}]
  %s2 = inlined_call_operand.vmem [shape: s32[2,8,1], index: 2, kind: input, shape index: {}]
  %s3 = inlined_call_operand.vmem [shape: f32[2,8,4], index: 3, kind: input, shape index: {}]
  %s4 = inlined_call_operand.hbm [shape: f32[2,8,16], index: 4, kind: output, shape index: {}]
  %s5 = sld [smem:[#allocation0]]
  $region49: #{tpu_custom_call.1} parent=0
    _
  %s7 = ssub.s32 1, %s5
  %s8 = scalar_select 0, %s7, %s5
  $region1: #{tpu_custom_call.1} parent=0
    #allocation2 [shape = 'u8[8192]{0}', space=vmem, size = 0x2000, scoped, tag = 'output window, operand 0']
    #allocation3 [shape = 's32[2]{0}', space=sflag, size = 0x8, scoped, tag = 'scoped memory for tpu_custom_call.1']
    %9 = vsyncpa [#allocation3], 0
    %s10 = scalar_lea.sflag [#allocation3], 1
    %11 = vsyncpa %s10, 0
    loop: start=0, step=1, limit=4
    $region2: #{tpu_custom_call.1} parent=1 // loop_pre_header
      _
    $region3: #{tpu_custom_call.1} parent=1 // loop_header
      %s13 = sphi 0, %s17
      %p14 = scmp.ge.s32.totalorder %s13, 4
      %s23 = sphi 0, %s25
      %s26 = sphi 0, %s23
      %s27 = sphi 0, %s26
      %s43 = sphi 0, %s27
      %s49 = sphi 0, %s51
      %s52 = sphi 0, %s49
      %s53 = sphi 0, %s52
      %s69 = sphi 0, %s53
      %s75 = sphi 0, %s77
      %s78 = sphi 0, %s75
      %s79 = sphi 0, %s78
      %s95 = sphi 0, %s79
      %s101 = sphi 0, %s103
      %s104 = sphi 0, %s101
      %s105 = sphi 0, %s104
      %s121 = sphi 0, %s105
      %s127 = sphi 0, %s129
      %s130 = sphi 0, %s127
      %s131 = sphi 0, %s130
      %s147 = sphi 0, %s131
    $region4: #{tpu_custom_call.1} parent=1 // loop_header_branch
      %16 = sbr.rel (%p14) target = $region8
    $region5: #{tpu_custom_call.1} parent=1 // loop_body
      %s18 = ssub.s32 %s13, 1
      %s19 = ssub.s32 %s13, 2
      %s20 = sadd.s32 %s13, 1
      %s21 = ssub.s32 %s13, %s20
      %p22 = scmp.eq.s32.totalorder %s21, 0
      %s24 = sadd.s32 %s23, 1
      %s25 = scalar_select %p22, %s23, %s24
      %p28 = pneg %p22
      %p29 = scmp.eq.s32.totalorder %s13, 1
      %p30 = por %p28, %p29
      %p31 = scmp.ne.s32.totalorder %s23, %s26
      %p32 = scmp.eq.s32.totalorder %s13, 0
      %p33 = por %p31, %p32
      %p34 = scmp.ne.s32.totalorder %s23, %s26
      %p35 = scmp.eq.s32.totalorder %s18, 1
      %p36 = por %p34, %p35
      %p37 = scmp.ne.s32.totalorder %s26, %s27
      %p38 = scmp.eq.s32.totalorder %s18, 0
      %p39 = por %p37, %p38
      %p40 = scmp.ne.s32.totalorder %s26, %s27
      %p41 = scmp.eq.s32.totalorder %s19, 1
      %p42 = por %p40, %p41
      %p44 = scmp.ne.s32.totalorder %s27, %s43
      %p45 = scmp.eq.s32.totalorder %s19, 0
      %p46 = por %p44, %p45
      %s47 = ssub.s32 %s13, %s20
      %p48 = scmp.eq.s32.totalorder %s47, 0
      %s50 = sadd.s32 %s49, 1
      %s51 = scalar_select %p48, %s49, %s50
      %p54 = pneg %p48
      %p55 = scmp.eq.s32.totalorder %s13, 1
      %p56 = por %p54, %p55
      %p57 = scmp.ne.s32.totalorder %s49, %s52
      %p58 = scmp.eq.s32.totalorder %s13, 0
      %p59 = por %p57, %p58
      %p60 = scmp.ne.s32.totalorder %s49, %s52
      %p61 = scmp.eq.s32.totalorder %s18, 1
      %p62 = por %p60, %p61
      %p63 = scmp.ne.s32.totalorder %s52, %s53
      %p64 = scmp.eq.s32.totalorder %s18, 0
      %p65 = por %p63, %p64
      %p66 = scmp.ne.s32.totalorder %s52, %s53
      %p67 = scmp.eq.s32.totalorder %s19, 1
      %p68 = por %p66, %p67
      %p70 = scmp.ne.s32.totalorder %s53, %s69
      %p71 = scmp.eq.s32.totalorder %s19, 0
      %p72 = por %p70, %p71
      %s73 = ssub.s32 %s13, %s20
      %p74 = scmp.eq.s32.totalorder %s73, 0
      %s76 = sadd.s32 %s75, 1
      %s77 = scalar_select %p74, %s75, %s76
      %p80 = pneg %p74
      %p81 = scmp.eq.s32.totalorder %s13, 1
      %p82 = por %p80, %p81
      %p83 = scmp.ne.s32.totalorder %s75, %s78
      %p84 = scmp.eq.s32.totalorder %s13, 0
      %p85 = por %p83, %p84
      %p86 = scmp.ne.s32.totalorder %s75, %s78
      %p87 = scmp.eq.s32.totalorder %s18, 1
      %p88 = por %p86, %p87
      %p89 = scmp.ne.s32.totalorder %s78, %s79
      %p90 = scmp.eq.s32.totalorder %s18, 0
      %p91 = por %p89, %p90
      %p92 = scmp.ne.s32.totalorder %s78, %s79
      %p93 = scmp.eq.s32.totalorder %s19, 1
      %p94 = por %p92, %p93
      %p96 = scmp.ne.s32.totalorder %s79, %s95
      %p97 = scmp.eq.s32.totalorder %s19, 0
      %p98 = por %p96, %p97
      %s99 = ssub.s32 %s13, %s20
      %p100 = scmp.eq.s32.totalorder %s99, 0
      %s102 = sadd.s32 %s101, 1
      %s103 = scalar_select %p100, %s101, %s102
      %p106 = pneg %p100
      %p107 = scmp.eq.s32.totalorder %s13, 1
      %p108 = por %p106, %p107
      %p109 = scmp.ne.s32.totalorder %s101, %s104
      %p110 = scmp.eq.s32.totalorder %s13, 0
      %p111 = por %p109, %p110
      %p112 = scmp.ne.s32.totalorder %s101, %s104
      %p113 = scmp.eq.s32.totalorder %s18, 1
      %p114 = por %p112, %p113
      %p115 = scmp.ne.s32.totalorder %s104, %s105
      %p116 = scmp.eq.s32.totalorder %s18, 0
      %p117 = por %p115, %p116
      %p118 = scmp.ne.s32.totalorder %s104, %s105
      %p119 = scmp.eq.s32.totalorder %s19, 1
      %p120 = por %p118, %p119
      %p122 = scmp.ne.s32.totalorder %s105, %s121
      %p123 = scmp.eq.s32.totalorder %s19, 0
      %p124 = por %p122, %p123
      %s125 = ssub.s32 %s13, %s20
      %p126 = scmp.eq.s32.totalorder %s125, 0
      %s128 = sadd.s32 %s127, 1
      %s129 = scalar_select %p126, %s127, %s128
      %p132 = pneg %p126
      %p133 = scmp.eq.s32.totalorder %s13, 1
      %p134 = por %p132, %p133
      %p135 = scmp.ne.s32.totalorder %s127, %s130
      %p136 = scmp.eq.s32.totalorder %s13, 0
      %p137 = por %p135, %p136
      %p138 = scmp.ne.s32.totalorder %s127, %s130
      %p139 = scmp.eq.s32.totalorder %s18, 1
      %p140 = por %p138, %p139
      %p141 = scmp.ne.s32.totalorder %s130, %s131
      %p142 = scmp.eq.s32.totalorder %s18, 0
      %p143 = por %p141, %p142
      %p144 = scmp.ne.s32.totalorder %s130, %s131
      %p145 = scmp.eq.s32.totalorder %s19, 1
      %p146 = por %p144, %p145
      %p148 = scmp.ne.s32.totalorder %s131, %s147
      %p149 = scmp.eq.s32.totalorder %s19, 0
      %p150 = por %p148, %p149
      %p151 = scmp.le.s32.totalorder 1, %s13
      %p152 = scmp.lt.s32.totalorder %s13, 3
      %p153 = pnand %p151, %p152
      %p154 = pneg %p153
      // Predicated region
      $region9: #{tpu_custom_call.1} parent=5 // pred_check
        _
      $region10: #{tpu_custom_call.1} parent=5 // pred_check_branch
        %156 = sbr.rel (%p153) target = $region12
      $region11: #{tpu_custom_call.1} parent=5 // pred_region
        %s157 = ssub.s32 %s13, 1
      $region12: #{tpu_custom_call.1} parent=5 // pred_fallthru
        _
      %p158 = scmp.lt.s32.totalorder %s13, 2
      // Predicated region
      $region13: #{tpu_custom_call.1} parent=5 // pred_check
        %p159 = pneg %p158
      $region14: #{tpu_custom_call.1} parent=5 // pred_check_branch
        %161 = sbr.rel (%p159) target = $region16
      $region15: #{tpu_custom_call.1} parent=5 // pred_region
        // Predicated region
        $region17: #{tpu_custom_call.1} parent=15 // pred_check
          %p162 = pneg %p33
        $region18: #{tpu_custom_call.1} parent=15 // pred_check_branch
          %164 = sbr.rel (%p162) target = $region20
        $region19: #{tpu_custom_call.1} parent=15 // pred_region
          %p165 = scmp.lt.s32.totalorder %s13, 1
          %s166 = scalar_select %p165, %s13, 1
          %s167 = smul.addr %s166, 2
          %s168 = smul.addr %s167, 8
          %s169 = scalar_lea.vmem %s0, %s168
        $region20: #{tpu_custom_call.1} parent=15 // pred_fallthru
          _
        // Predicated region
        $region21: #{tpu_custom_call.1} parent=15 // pred_check
          %p170 = pneg %p59
        $region22: #{tpu_custom_call.1} parent=15 // pred_check_branch
          %172 = sbr.rel (%p170) target = $region24
        $region23: #{tpu_custom_call.1} parent=15 // pred_region
          %p173 = scmp.lt.s32.totalorder %s13, 1
          %s174 = scalar_select %p173, %s13, 1
          %s175 = smul.addr %s174, 4
          %s176 = scalar_lea.vmem %s1, %s175
        $region24: #{tpu_custom_call.1} parent=15 // pred_fallthru
          _
        // Predicated region
        $region25: #{tpu_custom_call.1} parent=15 // pred_check
          %p177 = pneg %p85
        $region26: #{tpu_custom_call.1} parent=15 // pred_check_branch
          %179 = sbr.rel (%p177) target = $region28
        $region27: #{tpu_custom_call.1} parent=15 // pred_region
          %p180 = scmp.lt.s32.totalorder %s13, 1
          %s181 = scalar_select %p180, %s13, 1
          %s182 = smul.addr %s181, 8
          %s183 = scalar_lea.vmem %s2, %s182
        $region28: #{tpu_custom_call.1} parent=15 // pred_fallthru
          _
        // Predicated region
        $region29: #{tpu_custom_call.1} parent=15 // pred_check
          %p184 = pneg %p111
        $region30: #{tpu_custom_call.1} parent=15 // pred_check_branch
          %186 = sbr.rel (%p184) target = $region32
        $region31: #{tpu_custom_call.1} parent=15 // pred_region
          %p187 = scmp.lt.s32.totalorder %s13, 1
          %s188 = scalar_select %p187, %s13, 1
          %s189 = smul.addr %s188, 8
          %s190 = scalar_lea.vmem %s3, %s189
        $region32: #{tpu_custom_call.1} parent=15 // pred_fallthru
          _
      $region16: #{tpu_custom_call.1} parent=5 // pred_fallthru
        _
      %p191 = scmp.le.s32.totalorder 1, %s13
      %p192 = scmp.lt.s32.totalorder %s13, 3
      %p193 = pnand %p191, %p192
      %p194 = pneg %p193
      // Predicated region
      $region33: #{tpu_custom_call.1} parent=5 // pred_check
        _
      $region34: #{tpu_custom_call.1} parent=5 // pred_check_branch
        %196 = sbr.rel (%p193) target = $region36
      $region35: #{tpu_custom_call.1} parent=5 // pred_region
        %s197 = ssub.s32 %s13, 1
        %p198 = scmp.lt.s32.totalorder %s18, 1
        %s199 = scalar_select %p198, %s18, 1
        %s200 = smul.addr %s199, 2
        %s201 = smul.addr %s200, 8
        %s202 = scalar_lea.vmem %s0, %s201
        %p203 = pneg %p39
        %p204 = pneg %p36
        %p205 = scmp.lt.s32.totalorder %s18, 1
        %s206 = scalar_select %p205, %s18, 1
        %s207 = smul.addr %s206, 4
        %s208 = scalar_lea.vmem %s1, %s207
        %p209 = pneg %p65
        %p210 = pneg %p62
        %p211 = scmp.lt.s32.totalorder %s18, 1
        %s212 = scalar_select %p211, %s18, 1
        %s213 = smul.addr %s212, 8
        %s214 = scalar_lea.vmem %s2, %s213
        %p215 = pneg %p91
        %p216 = pneg %p88
        %p217 = scmp.lt.s32.totalorder %s18, 1
        %s218 = scalar_select %p217, %s18, 1
        %s219 = smul.addr %s218, 8
        %s220 = scalar_lea.vmem %s3, %s219
        %p221 = pneg %p117
        %p222 = pneg %p114
        %p223 = pneg %p143
        %p224 = pneg %p140
        %s225 = sand.u32 %s130, 1
        %s226 = scalar_lea.sflag [#allocation3], %s225
        %s227 = sand.u32 %s130, 1
        %s228 = smul.addr %s227, 8
        %s229 = scalar_lea.vmem [#allocation2], %s228
        %p230 = scmp.lt.s32.totalorder %s18, 1
        %s231 = scalar_select %p230, %s18, 1
        %s232 = smul.addr %s231, 2
        %s233 = smul.addr %s232, 8
        %s234 = scalar_lea.vmem %s0, %s233
        %p235 = scmp.lt.s32.totalorder %s18, 1
        %s236 = scalar_select %p235, %s18, 1
        %s237 = smul.addr %s236, 4
        %s238 = scalar_lea.vmem %s1, %s237
        %p239 = scmp.lt.s32.totalorder %s18, 1
        %s240 = scalar_select %p239, %s18, 1
        %s241 = smul.addr %s240, 8
        %s242 = scalar_lea.vmem %s2, %s241
        %p243 = scmp.lt.s32.totalorder %s18, 1
        %s244 = scalar_select %p243, %s18, 1
        %s245 = smul.addr %s244, 8
        %s246 = scalar_lea.vmem %s3, %s245
        %v247 = vld [vmem:[%s234] sm:$0xff]
        %v248 = vld [vmem:[%s234 + $0x8] sm:$0xff]
        %vm249 = vcmask 39936
        %v250 = vsel %vm249, %v247, -inf
        %251 = vmax.xlane.f32.xlu0 %v250
        %v252 = vpop.xlane.xlu0 %251
        %v253 = vsel %vm249, %v248, -inf
        %254 = vmax.xlane.f32.xlu0 %v253
        %v255 = vpop.xlane.xlu0 %254
        %v256 = vsub.f32 %v247, %v252
        %v257 = vsub.f32 %v248, %v255
        %v258 = vmul.f32 %v256, 1.442695
        %v259 = vpow.pop %v258
        %v260 = vmul.f32 %v257, 1.442695
        %v261 = vpow.pop %v260
        %v262 = vsel %vm249, %v259, 0.0
        %263 = vadd.xlane.f32.xlu0 %v262
        %v264 = vpop.xlane.xlu0 %263
        %v265 = vsel %vm249, %v261, 0.0
        %266 = vadd.xlane.f32.xlu0 %v265
        %v267 = vpop.xlane.xlu0 %266
        %v268 = vrcp.pop %v264
        %v269 = vmul.f32 %v264, %v268
        %v270 = vsub.f32 1.0, %v269
        %v271 = vmul.f32 %v268, %v270
        %v272 = vadd.f32 %v268, %v271
        %vm273 = vweird.f32 %v264
        %vm274 = vweird.f32 %v268
        %vm275 = vmor %vm273, %vm274
        %v276 = vsel %vm275, %v268, %v272
        %v277 = vand.u32 2147483647, %v264
        %vm278 = vcmp.eq.f32.partialorder %v277, 8.507059e+37
        %v279 = vand.u32 %v264, 2147483648
        %v280 = vor.u32 1.1754944e-38, %v279
        %v281 = vsel %vm278, %v280, %v276
        %v282 = vmul.f32 %v259, %v281
        %v283 = vrcp.pop %v267
        %v284 = vmul.f32 %v267, %v283
        %v285 = vsub.f32 1.0, %v284
        %v286 = vmul.f32 %v283, %v285
        %v287 = vadd.f32 %v283, %v286
        %vm288 = vweird.f32 %v267
        %vm289 = vweird.f32 %v283
        %vm290 = vmor %vm288, %vm289
        %v291 = vsel %vm290, %v283, %v287
        %v292 = vand.u32 2147483647, %v267
        %vm293 = vcmp.eq.f32.partialorder %v292, 8.507059e+37
        %v294 = vand.u32 %v267, 2147483648
        %v295 = vor.u32 1.1754944e-38, %v294
        %v296 = vsel %vm293, %v295, %v291
        %v297 = vmul.f32 %v261, %v296
        %v298 = vld [vmem:[%s242] sm:$0xff]
        %v299 = vlaneseq
        %v300 = vand.u32 %v299, 127
        %301 = vset.pattern.permute.xlu0 0
        %302 = vperm.xlu0 %301, %v298
        %v303 = vpop.permute.xlu0 %302
        %vm304 = vcmp.eq.s32.totalorder %v300, %v303
        %v305 = vsel %vm304, 1, 0
        %v306 = vcvt.s32.f32 %v305
        %v308 = vsel %vm249, %v306, 0
        %v311 = vsel %vm249, %v282, 0
        %v314 = vsel %vm249, %v297, 0
        %316 = vmatpush.xpose.msra.mxu0 0.0
        %317 = vmatpush.xpose.msra.mxu0 0.0
        %318 = vmatpush.xpose.msra.mxu0 0.0
        %319 = vmatpush.xpose.msra.mxu0 0.0
        %320 = vmatpush.xpose.msra.mxu0 0.0
        %321 = vmatpush.xpose.msra.mxu0 0.0
        %322 = vmatpush.xpose.msra.mxu0 0.0
        %323 = vmatpush.xpose.msra.mxu0 0.0
        %324 = vmatpush.xpose.msra.mxu0 0.0
        %325 = vmatpush.xpose.msra.mxu0 0.0
        %326 = vmatpush.xpose.msra.mxu0 0.0
        %327 = vmatpush.xpose.msra.mxu0 0.0
        %328 = vmatpush.xpose.msra.mxu0 0.0
        %329 = vmatpush.xpose.msra.mxu0 0.0
        %330 = vmatpush.xpose.msra.mxu0 %v314
        %331 = vmatpush.xpose.msra.mxu0 %v311
        %332 = vmatmul.f32.gmra.mxu0 %v308
        %v333 = vpop.f32.mrf.mxu0
        %v334 = vadd.f32 0.0, %v333
        %335 = vdwg.mxu0
        %v336 = vsub.f32 0.0, %v334
        %v337 = vld [vmem:[%s238] sm:$0xf]
        %v338 = vld [vmem:[%s246] sm:$0xff]
        %v339 = vperm.slane %v337, 0
        %341 = vset.pattern.permute.xlu0 0
        %342 = vperm.xlu0 %341, %v338
        %v343 = vpop.permute.xlu0 %342
        %v345 = vsub.f32 %v339, %v343
        %v346 = vand.u32 2147483647, %v345
        %v347 = vperm.slane %v337, 1
        %348 = vset.pattern.permute.xlu0 1
        %349 = vperm.xlu0 %348, %v338
        %v350 = vpop.permute.xlu0 %349
        %v352 = vsub.f32 %v347, %v350
        %v353 = vand.u32 2147483647, %v352
        %v354 = vadd.f32 %v346, %v353
        %v355 = vperm.slane %v337, 2
        %356 = vset.pattern.permute.xlu0 2
        %357 = vperm.xlu0 %356, %v338
        %v358 = vpop.permute.xlu0 %357
        %v360 = vsub.f32 %v355, %v358
        %v361 = vand.u32 2147483647, %v360
        %v362 = vadd.f32 %v354, %v361
        %v363 = vperm.slane %v337, 3
        %364 = vset.pattern.permute.xlu0 3
        %365 = vperm.xlu0 %364, %v338
        %v366 = vpop.permute.xlu0 %365
        %v368 = vsub.f32 %v363, %v366
        %v369 = vand.u32 2147483647, %v368
        %v370 = vadd.f32 %v362, %v369
        %v371 = vmul.f32 %v337, 0.5
        %v373 = vrot.slane %v371, 2
        %v375 = vsub.f32 %v337, %v373
        %v376 = vadd.f32 %v337, %v373
        %v377 = vmul.f32 %v338, 0.5
        %379 = vrot.lane.b32.xlu0 %v377, 126
        %v380 = vpop.permute.xlu0 %379
        %v382 = vsub.f32 %v338, %v380
        %v383 = vadd.f32 %v338, %v380
        %v384 = vperm.slane %v376, 0
        %386 = vset.pattern.permute.xlu0 0
        %387 = vperm.xlu0 %386, %v383
        %v388 = vpop.permute.xlu0 %387
        %v390 = vmin.f32 %v384, %v388
        %v391 = vperm.slane %v375, 0
        %393 = vset.pattern.permute.xlu0 0
        %394 = vperm.xlu0 %393, %v382
        %v395 = vpop.permute.xlu0 %394
        %v397 = vmax.f32 %v391, %v395
        %v398 = vsub.f32 %v390, %v397
        %v399 = vmax.f32 %v398, 0.0
        %v400 = vperm.slane %v376, 1
        %401 = vset.pattern.permute.xlu0 1
        %402 = vperm.xlu0 %401, %v383
        %v403 = vpop.permute.xlu0 %402
        %v405 = vmin.f32 %v400, %v403
        %v406 = vperm.slane %v375, 1
        %407 = vset.pattern.permute.xlu0 1
        %408 = vperm.xlu0 %407, %v382
        %v409 = vpop.permute.xlu0 %408
        %v411 = vmax.f32 %v406, %v409
        %v412 = vsub.f32 %v405, %v411
        %v413 = vmax.f32 %v412, 0.0
        %v414 = vmul.f32 %v399, %v413
        %v415 = vsub.f32 %v376, %v375
        %v417 = vrot.slane %v415, 1
        %v419 = vmul.f32 %v415, %v417
        %v420 = vsub.f32 %v383, %v382
        %422 = vrot.lane.b32.xlu0 %v420, 127
        %v423 = vpop.permute.xlu0 %422
        %v425 = vmul.f32 %v420, %v423
        %v426 = vperm.slane %v419, 0
        %428 = vset.pattern.permute.xlu0 0
        %429 = vperm.xlu0 %428, %v425
        %v430 = vpop.permute.xlu0 %429
        %v432 = vadd.f32 %v426, %v430
        %v433 = vsub.f32 %v432, %v414
        %v434 = vadd.f32 %v433, 1e-07
        %v435 = vrcp.pop %v434
        %v436 = vmul.f32 %v434, %v435
        %v437 = vsub.f32 1.0, %v436
        %v438 = vmul.f32 %v435, %v437
        %v439 = vadd.f32 %v435, %v438
        %vm440 = vweird.f32 %v434
        %vm441 = vweird.f32 %v435
        %vm442 = vmor %vm440, %vm441
        %v443 = vsel %vm442, %v435, %v439
        %v444 = vand.u32 2147483647, %v434
        %vm445 = vcmp.eq.f32.partialorder %v444, 8.507059e+37
        %v446 = vand.u32 %v434, 2147483648
        %v447 = vor.u32 1.1754944e-38, %v446
        %v448 = vsel %vm445, %v447, %v443
        %v449 = vmul.f32 %v414, %v448
        %v450 = vmax.f32 %v384, %v388
        %v451 = vmin.f32 %v391, %v395
        %v452 = vsub.f32 %v450, %v451
        %v453 = vmax.f32 %v400, %v403
        %v454 = vmin.f32 %v406, %v409
        %v455 = vsub.f32 %v453, %v454
        %v456 = vmul.f32 %v452, %v455
        %v457 = vsub.f32 %v456, %v433
        %v458 = vadd.f32 %v456, 1e-07
        %v459 = vrcp.pop %v458
        %v460 = vmul.f32 %v458, %v459
        %v461 = vsub.f32 1.0, %v460
        %v462 = vmul.f32 %v459, %v461
        %v463 = vadd.f32 %v459, %v462
        %vm464 = vweird.f32 %v458
        %vm465 = vweird.f32 %v459
        %vm466 = vmor %vm464, %vm465
        %v467 = vsel %vm466, %v459, %v463
        %v468 = vand.u32 2147483647, %v458
        %vm469 = vcmp.eq.f32.partialorder %v468, 8.507059e+37
        %v470 = vand.u32 %v458, 2147483648
        %v471 = vor.u32 1.1754944e-38, %v470
        %v472 = vsel %vm469, %v471, %v467
        %v473 = vmul.f32 %v457, %v472
        %v474 = vsub.f32 %v449, %v473
        %v475 = vsub.f32 1.0, %v474
        %v476 = vadd.f32 %v336, %v370
        %v477 = vadd.f32 %v476, %v475
        %vm478 = vcmask 130048
        %479 = vst.msk [vmem:[%s229] sm:$0xff] %vm478, %v477
        %s480 = sand.u32 %s130, 1
        %s481 = scalar_lea.sflag [#allocation3], %s480
        %s482 = sand.u32 %s130, 1
        %s483 = smul.addr %s482, 8
        %s484 = scalar_lea.vmem [#allocation2], %s483
        // Predicated region
        $region37: #{tpu_custom_call.1} parent=35 // pred_check
          %p485 = pneg %p140
        $region38: #{tpu_custom_call.1} parent=35 // pred_check_branch
          %487 = sbr.rel (%p485) target = $region40
        $region39: #{tpu_custom_call.1} parent=35 // pred_region
          %489 = vsyncadd %s481, 0
          %s490 = smul.addr %s18, 8
          %s491 = scalar_lea.hbm %s4, %s490
          %s493 = sshll.u32 %s484, 4
          %s494 = int_to_ptr.vmem [resolvable:$true] %s493
          %s495 = sshll.u32 %s491, 4
          %s496 = int_to_ptr.hbm [resolvable:$true] %s495
          %498 = dma.vmem_to_hbm [thread:$0]  %s494, 128, %s496, %s481
        $region40: #{tpu_custom_call.1} parent=35 // pred_fallthru
          _
      $region36: #{tpu_custom_call.1} parent=5 // pred_fallthru
        _
      %p499 = scmp.le.s32.totalorder 2, %s13
      // Predicated region
      $region41: #{tpu_custom_call.1} parent=5 // pred_check
        %p500 = pneg %p499
      $region42: #{tpu_custom_call.1} parent=5 // pred_check_branch
        %502 = sbr.rel (%p500) target = $region44
      $region43: #{tpu_custom_call.1} parent=5 // pred_region
        %s503 = ssub.s32 %s13, 2
        // Predicated region
        $region45: #{tpu_custom_call.1} parent=43 // pred_check
          %p504 = pneg %p146
        $region46: #{tpu_custom_call.1} parent=43 // pred_check_branch
          %506 = sbr.rel (%p504) target = $region48
        $region47: #{tpu_custom_call.1} parent=43 // pred_region
          %s507 = sand.u32 %s131, 1
          %s508 = scalar_lea.sflag [#allocation3], %s507
          %s509 = sand.u32 %s131, 1
          %s510 = smul.addr %s509, 8
          %s511 = scalar_lea.vmem [#allocation2], %s510
          %513 = dma.done %s508, 128
        $region48: #{tpu_custom_call.1} parent=43 // pred_fallthru
          _
      $region44: #{tpu_custom_call.1} parent=5 // pred_fallthru
        _
    $region6: #{tpu_custom_call.1} parent=1 // loop_footer
      %s17 = sadd.s32 1, %s13
    $region7: #{tpu_custom_call.1} parent=1 // loop_footer_branch
      %12 = sbr.rel target = $region3
    $region8: #{tpu_custom_call.1} parent=1 // loop_exit
      _
    %514 = vsyncpa [#allocation3], 1
    %s515 = scalar_lea.sflag [#allocation3], 1
    %516 = vsyncpa %s515, 1

</llo_original>
